<compile_context>
chip_gen: v6e
topology: v6e:2x2x1
jax: 0.10.0
libtpu: 0.0.40
codegen_flags: <defaults>
</compile_context>

<pallas_src>
import functools

import jax
import jax.numpy as jnp
from jax.experimental import pallas as pl
from jax.experimental.pallas import tpu as pltpu


def _double_dropout_kernel(seed_ref, x_ref, o_ref, *, rate: float):
    """One fused mask equivalent to two independent nn.Dropout(rate) passes."""
    x = x_ref[...]
    tr, lane = x.shape

    keep2 = (1.0 - rate) ** 2          # P(kept by both dropouts)
    scale = 1.0 / keep2                # combined inverted-dropout scale
    # Integer threshold in [0, 2^31): compare hashed bits without any
    # int->float conversion or unsigned comparisons.
    threshold = min(int(round(keep2 * (1 << 31))), (1 << 31) - 1)

    # Global linear element index (unique across grid tiles -> uncorrelated
    # masks per tile even though every tile sees the same seed scalar).
    row = jax.lax.broadcasted_iota(jnp.int32, (tr, lane), 0) + pl.program_id(0) * tr
    col = jax.lax.broadcasted_iota(jnp.int32, (tr, lane), 1)
    idx = (row * lane + col).astype(jnp.uint32)

    # Counter-based hash (splitmix32 / murmur-finalizer style).  Pure 32-bit
    # integer VPU ops: works on TPU hardware and in interpret mode.
    seed = seed_ref[0].astype(jnp.uint32)
    h = idx ^ (seed * jnp.uint32(0x9E3779B9))
    h = (h ^ (h >> jnp.uint32(16))) * jnp.uint32(0x21F0AAAD)
    h = (h ^ (h >> jnp.uint32(15))) * jnp.uint32(0x735A2D97)
    h = h ^ (h >> jnp.uint32(15))

    # Top 31 bits -> uniform int in [0, 2^31); keep iff below threshold.
    r = (h >> jnp.uint32(1)).astype(jnp.int32)
    keep_mask = r < jnp.int32(threshold)

    # Stay in the input dtype (no f32 upcast round trip).
    o_ref[...] = jnp.where(keep_mask, x * scale, jnp.zeros_like(x))


def double_dropout(x, seed, *, rate: float):
    """Applies nn.Dropout(rate) twice (training semantics) to any-shaped x."""
    if rate <= 0.0:
        # nn.Dropout(0.0) (and eval mode) is identity: skip HBM traffic entirely.
        return x

    orig_shape = x.shape
    orig_dtype = x.dtype
    flat = x.reshape(-1)
    total = flat.shape[0]
    itemsize = jnp.dtype(orig_dtype).itemsize

    # Lane-dense layout: widest lane count (multiple of 128) the data supports,
    # so output stores are unmasked full-width vst on all generations.
    lane = 128
    for cand in (2048, 1024, 512, 256, 128):
        if total >= cand * 8:
            lane = cand
            break

    # Rows, rounded up to the sublane granularity (8).
    rows = (total + lane - 1) // lane
    rows = ((rows + 7) // 8) * 8

    # Row tile: keep one block <= ~2 MiB so (2 in + 2 out) double-buffered
    # blocks stay well inside every generation's scoped VMEM (incl. v7x 64 MiB).
    max_rows_per_block = max(8, (2 * 1024 * 1024) // (lane * itemsize))
    max_rows_per_block = (max_rows_per_block // 8) * 8
    tr = min(rows, max_rows_per_block)
    rows = ((rows + tr - 1) // tr) * tr      # make the grid divide evenly

    padded = rows * lane
    if padded != total:
        flat = jnp.pad(flat, (0, padded - total))
    x2d = flat.reshape(rows, lane)

    kernel = functools.partial(_double_dropout_kernel, rate=float(rate))
    seed_arr = jnp.asarray([seed], jnp.int32)

    y2d = pl.pallas_call(
        kernel,
        out_shape=jax.ShapeDtypeStruct((rows, lane), orig_dtype),
        grid_spec=pltpu.PrefetchScalarGridSpec(
            num_scalar_prefetch=1,               # seed lands in SMEM
            grid=(rows // tr,),
            in_specs=[pl.BlockSpec((tr, lane), lambda i, seed_ref: (i, 0))],
            out_specs=pl.BlockSpec((tr, lane), lambda i, seed_ref: (i, 0)),
        ),
        compiler_params=pltpu.CompilerParams(
            dimension_semantics=("parallel",),   # shard row tiles across TCs (v7x)
            vmem_limit_bytes=32 * 1024 * 1024,
        ),
    )(seed_arr, x2d)

    return y2d.reshape(-1)[:total].reshape(orig_shape)


class ResNetPallas:
    """Mirror of the PyTorch ResNet module above (forward = dropout applied twice)."""

    def __init__(self, num_classes: int, dropout_rate: float = 0.0,
                 expansion: int = 4, key=None):
        self.dropout_rate = float(dropout_rate)
        key = jax.random.PRNGKey(0) if key is None else key
        k1, k2 = jax.random.split(key)
        # Parameters declared by the PyTorch module's __init__ (unused in forward()).
        self.bn1_gamma = jnp.ones((64,), jnp.float32)
        self.bn1_beta = jnp.zeros((64,), jnp.float32)
        self.bn1_mean = jnp.zeros((64,), jnp.float32)
        self.bn1_var = jnp.ones((64,), jnp.float32)
        fc_in = 512 * expansion
        self.fc_w = 0.01 * jax.random.normal(k1, (num_classes, fc_in), jnp.float32)
        self.fc_b = 0.01 * jax.random.normal(k2, (num_classes,), jnp.float32)

    def forward(self, x_nchw, seed: int = 0):
        # forward(): x = dropout(x); x = dropout(x); return x
        return double_dropout(x_nchw, seed, rate=self.dropout_rate)


if __name__ == "__main__":
    key = jax.random.PRNGKey(0)
    # Small NCHW input consistent with a conv-net forward: [N=2, C=4, H=16, W=16]
    x = jax.random.normal(key, (2, 4, 16, 16), jnp.float32)

    # Default module: dropout_rate = 0.0 -> forward is an exact identity
    # (wrapper short-circuits; no kernel launch, matching nn.Dropout(0.0)).
    model = ResNetPallas(num_classes=10, dropout_rate=0.0)
    y = jax.block_until_ready(model.forward(x))
    assert y.shape == x.shape and y.dtype == x.dtype
    assert bool(jnp.allclose(y, x)), "dropout(p=0.0) twice must be identity"

    # Training-semantics dropout path (p > 0) exercises the Pallas kernel.
    rate = 0.25
    model_p = ResNetPallas(num_classes=10, dropout_rate=rate)
    y_p = jax.block_until_ready(model_p.forward(x, seed=123))
    assert y_p.shape == x.shape and y_p.dtype == x.dtype

    keep2 = (1.0 - rate) ** 2
    scale = 1.0 / keep2
    kept = y_p != 0
    # Every kept element must equal x * 1/keep^2; dropped elements are exactly 0.
    assert bool(jnp.all(jnp.where(kept, jnp.isclose(y_p, x * scale, rtol=1e-5), True)))
    keep_frac = float(jnp.mean(kept.astype(jnp.float32)))
    assert abs(keep_frac - keep2) < 0.12, f"keep fraction {keep_frac} vs expected {keep2}"

    print("KERNEL_OK")
</pallas_src>

<mosaic_0001>
module attributes {stable_mosaic.version = 11 : i64} {
  func.func @_double_dropout_kernel(%arg0: i32, %arg1: memref<1xi32, #tpu.memory_space<smem>>, %arg2: memref<8x256xf32, #tpu.memory_space<vmem>>, %arg3: memref<8x256xf32, #tpu.memory_space<vmem>>) attributes {dimension_semantics = [#tpu.dimension_semantics<parallel>], iteration_bounds = array<i64: 1>, scalar_prefetch = 1 : i64, scratch_operands = 0 : i64, tpu.core_type = #tpu.core_type<tc>, window_params = [{transform_indices = @transform_0, window_bounds = array<i64: 8, 256>}, {transform_indices = @transform_1, window_bounds = array<i64: 8, 256>}]} {
    %c0 = arith.constant 0 : index
    %c0_0 = arith.constant 0 : index
    %0 = vector.load %arg2[%c0, %c0_0] : memref<8x256xf32, #tpu.memory_space<vmem>>, vector<8x256xf32>
    %1 = tpu.iota {dimensions = array<i32: 0>} : vector<8x256xi32>
    %c8_i32 = arith.constant 8 : i32
    %2 = arith.muli %arg0, %c8_i32 : i32
    %3 = vector.broadcast %2 : i32 to vector<8x256xi32>
    %4 = arith.addi %1, %3 : vector<8x256xi32>
    %5 = tpu.iota {dimensions = array<i32: 1>} : vector<8x256xi32>
    %c256_i32 = arith.constant 256 : i32
    %6 = vector.broadcast %c256_i32 : i32 to vector<8x256xi32>
    %7 = arith.muli %4, %6 : vector<8x256xi32>
    %8 = arith.addi %7, %5 : vector<8x256xi32>
    %c0_1 = arith.constant 0 : index
    %9 = memref.load %arg1[%c0_1] : memref<1xi32, #tpu.memory_space<smem>>
    %c-1640531527_i32 = arith.constant -1640531527 : i32
    %10 = arith.muli %9, %c-1640531527_i32 : i32
    %11 = vector.broadcast %10 : i32 to vector<8x256xi32>
    %12 = arith.xori %8, %11 : vector<8x256xi32>
    %c16_i32 = arith.constant 16 : i32
    %13 = vector.broadcast %c16_i32 : i32 to vector<8x256xi32>
    %14 = arith.shrui %12, %13 : vector<8x256xi32>
    %15 = arith.xori %12, %14 : vector<8x256xi32>
    %c569420461_i32 = arith.constant 569420461 : i32
    %16 = vector.broadcast %c569420461_i32 : i32 to vector<8x256xi32>
    %17 = arith.muli %15, %16 : vector<8x256xi32>
    %c15_i32 = arith.constant 15 : i32
    %18 = vector.broadcast %c15_i32 : i32 to vector<8x256xi32>
    %19 = arith.shrui %17, %18 : vector<8x256xi32>
    %20 = arith.xori %17, %19 : vector<8x256xi32>
    %c1935289751_i32 = arith.constant 1935289751 : i32
    %21 = vector.broadcast %c1935289751_i32 : i32 to vector<8x256xi32>
    %22 = arith.muli %20, %21 : vector<8x256xi32>
    %c15_i32_2 = arith.constant 15 : i32
    %23 = vector.broadcast %c15_i32_2 : i32 to vector<8x256xi32>
    %24 = arith.shrui %22, %23 : vector<8x256xi32>
    %25 = arith.xori %22, %24 : vector<8x256xi32>
    %c1_i32 = arith.constant 1 : i32
    %26 = vector.broadcast %c1_i32 : i32 to vector<8x256xi32>
    %27 = arith.shrui %25, %26 : vector<8x256xi32>
    %c1207959552_i32 = arith.constant 1207959552 : i32
    %28 = vector.broadcast %c1207959552_i32 : i32 to vector<8x256xi32>
    %29 = arith.cmpi slt, %27, %28 : vector<8x256xi32>
    %cst = arith.constant 1.77777779 : f32
    %30 = vector.broadcast %cst : f32 to vector<8x256xf32>
    %31 = arith.mulf %0, %30 : vector<8x256xf32>
    %cst_3 = arith.constant 0.000000e+00 : f32
    %32 = vector.broadcast %cst_3 : f32 to vector<8x256xf32>
    %33 = arith.select %29, %31, %32 : vector<8x256xi1>, vector<8x256xf32>
    %c0_4 = arith.constant 0 : index
    %c0_5 = arith.constant 0 : index
    %34 = vector.load %arg3[%c0_4, %c0_5] : memref<8x256xf32, #tpu.memory_space<vmem>>, vector<8x256xf32>
    tpu.vector_store %arg3[%c0_4, %c0_5], %33 {strides = array<i32>} : memref<8x256xf32, #tpu.memory_space<vmem>>, vector<8x256xf32>,
    return
  }
  func.func @transform_0(%arg0: i32, %arg1: memref<1xi32, #tpu.memory_space<smem>>) -> (i32, i32) {
    %c0_i32 = arith.constant 0 : i32
    %c0_i32_0 = arith.constant 0 : i32
    return %arg0, %c0_i32 : i32, i32
  }
  func.func @transform_1(%arg0: i32, %arg1: memref<1xi32, #tpu.memory_space<smem>>) -> (i32, i32) {
    %c0_i32 = arith.constant 0 : i32
    %c0_i32_0 = arith.constant 0 : i32
    return %arg0, %c0_i32 : i32, i32
  }
}

</mosaic_0001>

<llo_original>
// kernel: tpu_custom_call.1
$region0: #{tpu_custom_call.1}
  #allocation0 [shape = 'u32[]', space=smem, size = 0x4, offset = 0x4, fixed_abs, tag = 'smem constant byte address 0x4 - core index']
  #allocation1 [shape = 'u32[144,128]{1,0:T(1,128)}', space=vmem, size = 0x12000, scoped, tag = 'internal scratch']
  #allocation2 [shape = 's32[1]{0}', space=sflag, size = 0x4, scoped, tag = 'scoped memory for tpu_custom_call.1']
  #allocation3 [shape = 's32[1]{0:T(128)S(6)}', space=smem, size = 0x200, scoped, tag = 'prefetched SMEM operand 0']
  %s0 = inlined_call_operand.<no memory space> [shape: s32[1], index: 0, kind: input, shape index: {}]
  %s1 = inlined_call_operand.hbm [shape: f32[8,256], index: 1, kind: input, shape index: {}]
  %s2 = inlined_call_operand.hbm [shape: f32[8,256], index: 2, kind: output, shape index: {}]
  %s3 = sld [smem:[#allocation0]]
  $region18: #{tpu_custom_call.1} parent=0
    _
  %s5 = ssub.s32 1, %s3
  %s6 = scalar_select 0, %s5, %s3
  %7 = sst [smem:[#allocation3]] %s0
  $region1: #{tpu_custom_call.1} parent=0
    #allocation4 [shape = 'u8[8192]{0}', space=vmem, size = 0x2000, scoped, tag = 'input window, operand 1, single buffered']
    #allocation5 [shape = 's32[1]{0}', space=sflag, size = 0x4, scoped, tag = 'scoped memory for tpu_custom_call.1']
    #allocation6 [shape = 's32[1]{0}', space=sflag, size = 0x4, scoped, tag = 'scoped memory for tpu_custom_call.1']
    #allocation7 [shape = 'u8[8192]{0}', space=vmem, size = 0x2000, scoped, tag = 'output window, operand 0, single buffered']
    %8 = vsyncpa [#allocation5], 0
    %9 = vsyncpa [#allocation6], 0
    // Predicated region
    $region2: #{tpu_custom_call.1} parent=1 // pred_check
      _
    $region3: #{tpu_custom_call.1} parent=1 // pred_check_branch
      %11 = sbr.rel (0) target = $region5
    $region4: #{tpu_custom_call.1} parent=1 // pred_region
      %s13 = ssub.s32 256, 256
      %14 = vsyncadd [#allocation5], %s13
      %s16 = sshll.u32 [#allocation4], 4
      %s17 = int_to_ptr.vmem [resolvable:$true] %s16
      %19 = dma.hbm_to_vmem [thread:$0]  %s1, 256, %s17, [#allocation5]
    $region5: #{tpu_custom_call.1} parent=1 // pred_fallthru
      _
    // Predicated region
    $region6: #{tpu_custom_call.1} parent=1 // pred_check
      _
    $region7: #{tpu_custom_call.1} parent=1 // pred_check_branch
      %21 = sbr.rel (0) target = $region9
    $region8: #{tpu_custom_call.1} parent=1 // pred_region
      %22 = dma.done [#allocation5], 256
    $region9: #{tpu_custom_call.1} parent=1 // pred_fallthru
      _
    %v23 = vld [vmem:[#allocation4] sm:$0xff]
    %v24 = vld [vmem:[#allocation4 + $0x8] sm:$0xff]
    %v25 = vlaneseq
    %v26 = vshrl.u32 %v25, 7
    %s27 = smul.u32 0, 8
    %v28 = vstv %s27
    %v29 = vadd.s32 %v26, %v28
    %v30 = vlaneseq
    %v31 = vand.u32 %v30, 127
    %v32 = vadd.s32 %v31, 128
    %v33 = vmul.u32 %v29, 256
    %v34 = vadd.s32 %v33, %v31
    %v35 = vadd.s32 %v33, %v32
    %s36 = sld [smem:[#allocation3]]
    %s37 = smul.u32 %s36, 2654435769
    %v38 = vstv %s37
    %v39 = vxor.u32 %v34, %v38
    %v40 = vxor.u32 %v35, %v38
    %v41 = vshrl.u32 %v39, 16
    %v42 = vshrl.u32 %v40, 16
    %v43 = vxor.u32 %v39, %v41
    %v44 = vxor.u32 %v40, %v42
    %v45 = vmul.u32 %v43, 569420461
    %v46 = vmul.u32 %v44, 569420461
    %v47 = vshrl.u32 %v45, 15
    %v48 = vshrl.u32 %v46, 15
    %v49 = vxor.u32 %v45, %v47
    %v50 = vxor.u32 %v46, %v48
    %v51 = vmul.u32 %v49, 1935289751
    %v52 = vmul.u32 %v50, 1935289751
    %v53 = vshrl.u32 %v51, 15
    %v54 = vshrl.u32 %v52, 15
    %v55 = vxor.u32 %v51, %v53
    %v56 = vxor.u32 %v52, %v54
    %v57 = vshrl.u32 %v55, 1
    %v58 = vshrl.u32 %v56, 1
    %vm59 = vcmp.lt.s32.totalorder %v57, 1207959552
    %vm60 = vcmp.lt.s32.totalorder %v58, 1207959552
    %v61 = vmul.f32 %v23, 1.7777778
    %v62 = vmul.f32 %v24, 1.7777778
    %v63 = vsel %vm59, %v61, 0.0
    %v64 = vsel %vm60, %v62, 0.0
    %65 = vst [vmem:[#allocation7] sm:$0xff] %v63
    %66 = vst [vmem:[#allocation7 + $0x8] sm:$0xff] %v64
    // Predicated region
    $region10: #{tpu_custom_call.1} parent=1 // pred_check
      _
    $region11: #{tpu_custom_call.1} parent=1 // pred_check_branch
      %68 = sbr.rel (0) target = $region13
    $region12: #{tpu_custom_call.1} parent=1 // pred_region
      %s70 = ssub.s32 256, 256
      %71 = vsyncadd [#allocation6], %s70
      %s73 = sshll.u32 [#allocation7], 4
      %s74 = int_to_ptr.vmem [resolvable:$true] %s73
      %76 = dma.vmem_to_hbm [thread:$0]  %s74, 256, %s2, [#allocation6]
    $region13: #{tpu_custom_call.1} parent=1 // pred_fallthru
      _
    // Predicated region
    $region14: #{tpu_custom_call.1} parent=1 // pred_check
      _
    $region15: #{tpu_custom_call.1} parent=1 // pred_check_branch
      %78 = sbr.rel (0) target = $region17
    $region16: #{tpu_custom_call.1} parent=1 // pred_region
      %79 = dma.done [#allocation6], 256
    $region17: #{tpu_custom_call.1} parent=1 // pred_fallthru
      _
    %80 = vsyncpa [#allocation5], 1
    %81 = vsyncpa [#allocation6], 1

</llo_original>
